<compile_context>
chip_gen: v7x
topology: tpu7x:2x2x1
jax: 0.10.0
libtpu: 0.0.40
codegen_flags: <defaults>
</compile_context>

<pallas_src>
import jax
import jax.numpy as jnp
from jax import lax
from jax.experimental import pallas as pl
from jax.experimental.pallas import tpu as pltpu


def _cdiv(a, b):
    return (a + b - 1) // b


def _round_up(a, b):
    return _cdiv(a, b) * b


def _make_bce_kernel(*, block_rows, lane, acc_rows, inner_steps, n_blocks,
                     valid_rows, needs_mask, binary_target):
    groups = block_rows // acc_rows

    def kernel(pred_ref, target_ref, out_ref, acc_ref):
        j = pl.program_id(1)  # reduction ("arbitrary") axis

        @pl.when(j == 0)
        def _init():
            acc_ref[...] = jnp.zeros_like(acc_ref)

        p = pred_ref[...].astype(jnp.float32)
        t = target_ref[...].astype(jnp.float32)

        if binary_target:
            # Valid only for hard {0,1} labels: one EUP log per element.
            x = jnp.where(t > 0.5, p, 1.0 - p)
            loss = -jnp.maximum(jnp.log(x), -100.0)
        else:
            # PyTorch nn.BCELoss clamps each log term at -100.
            log_p = jnp.maximum(jnp.log(p), -100.0)
            log_1mp = jnp.maximum(jnp.log(1.0 - p), -100.0)
            # -(t*log_p + (1-t)*log_1mp), one fewer multiply.
            loss = -(log_1mp + t * (log_p - log_1mp))

        if needs_mask:
            # Zero out rows that lie beyond the real data (ragged last block
            # and/or the duplicated block used to balance the 2 shards).
            linear = pl.program_id(0) * inner_steps + j
            row0 = linear * block_rows
            row_idx = lax.broadcasted_iota(jnp.int32, (block_rows, lane), 0)
            loss = jnp.where(row0 + row_idx < valid_rows, loss, 0.0)

        # Sublane-axis reduce to an (acc_rows, lane) strip: pure VPU vreg adds.
        if groups > 1:
            contrib = loss.reshape(groups, acc_rows, lane).sum(axis=0)
        else:
            contrib = loss
        acc_ref[...] += contrib

        @pl.when(j == pl.num_programs(1) - 1)
        def _finalize():
            partial = jnp.sum(acc_ref[...])  # single small XLU reduce per shard
            out_ref[...] = jnp.broadcast_to(partial, out_ref.shape).astype(jnp.float32)

    return kernel


def bce_loss(pred, target, *, lane_width=2048, max_block_rows=None,
             vmem_limit_bytes=None, pred_dtype=None,
             target_dtype=jnp.bfloat16, binary_target=False):
    """BCELoss(weight=None, reduction='mean') on arbitrary same-shape pred/target.

    target_dtype=bf16 is exact for hard 0/1 labels; pass None for exact
    soft-target semantics.  binary_target=True enables the single-log fast
    path and is only valid for hard 0/1 labels.
    """
    # TODO(synk): per-element `weight` and reduction='sum'/'none' variants of
    # nn.BCELoss are not implemented (the module uses the defaults).
    assert pred.shape == target.shape
    total = 1
    for d in pred.shape:
        total *= int(d)

    # ---- generation-aware tiling defaults ---------------------------------
    if max_block_rows is None or vmem_limit_bytes is None:
        vmem_cap = 64 * 1024 * 1024
        try:
            info = pltpu.get_tpu_info()
            vmem_cap = int(getattr(info, "vmem_capacity_bytes", vmem_cap))
        except Exception:
            pass
        if vmem_cap >= 100 * 1024 * 1024:
            # v5e / v6e: 128 MiB physical VMEM — bigger blocks, raised limit.
            default_rows, default_vmem = 1024, 96 * 1024 * 1024
        else:
            # v7x: 64 MiB per TensorCore — keep the proven-safe config so
            # elementwise temporaries can never overflow physical VMEM.
            default_rows, default_vmem = 512, 48 * 1024 * 1024
        if max_block_rows is None:
            max_block_rows = default_rows
        if vmem_limit_bytes is None:
            vmem_limit_bytes = default_vmem
    max_block_rows = max(8, (int(max_block_rows) // 8) * 8)

    # ---- dtype of the streamed inputs (compute/accumulate stay f32) -------
    flat_p = pred.reshape(-1)
    flat_t = target.reshape(-1)
    if pred_dtype is not None:
        flat_p = flat_p.astype(pred_dtype)
    if target_dtype is not None:
        flat_t = flat_t.astype(target_dtype)

    # ---- lane-dense layout WITHOUT a host-side padding copy ----------------
    # Largest lane width (multiple of 128, <= lane_width) dividing `total`
    # exactly; prefer one that also makes rows a multiple of 8.
    cap = max(128, (int(lane_width) // 128) * 128)
    lane, best_any = 0, 0
    for cand in range(cap, 127, -128):
        if total % cand == 0:
            if best_any == 0:
                best_any = cand
            if (total // cand) % 8 == 0:
                lane = cand
                break
    if lane == 0:
        lane = best_any

    if lane == 0:
        # Rare fallback (total not a multiple of 128): pad the tail with
        # (pred=1, target=1), which contributes exactly 0 loss.  This is the
        # only path that materializes a copy of the inputs.
        lane = 128
        padded_total = _round_up(total, lane)
        pad = padded_total - total
        flat_p = jnp.concatenate([flat_p, jnp.ones((pad,), flat_p.dtype)])
        flat_t = jnp.concatenate([flat_t, jnp.ones((pad,), flat_t.dtype)])
    else:
        padded_total = total

    rows = padded_total // lane

    # Block rows: multiple of 8 (or the full dim when rows < 8), <= rows.
    if rows % 8 == 0:
        block_rows = min(max_block_rows, rows)
    elif rows < 8:
        block_rows = rows
    else:
        block_rows = min(max_block_rows, (rows // 8) * 8)
    block_rows = max(block_rows, 1)

    n_blocks = _cdiv(rows, block_rows)
    # Split the reduction across 2 shards (megacore parallelism on v7x; a
    # harmless extra loop iteration on v5e/v6e) when there is enough work.
    num_shards = 2 if n_blocks >= 2 else 1
    inner_steps = _cdiv(n_blocks, num_shards)

    # In-kernel masking is only compiled in when the grid can overrun `rows`.
    needs_mask = (rows % block_rows != 0) or (num_shards * inner_steps != n_blocks)

    acc_rows = 8 if (block_rows % 8 == 0) else block_rows

    p2d = flat_p.reshape(rows, lane)   # copy-free reshapes
    t2d = flat_t.reshape(rows, lane)

    kernel = _make_bce_kernel(
        block_rows=block_rows, lane=lane, acc_rows=acc_rows,
        inner_steps=inner_steps, n_blocks=n_blocks, valid_rows=rows,
        needs_mask=needs_mask, binary_target=binary_target)

    def in_map(s, j):
        # Clamp so a duplicated shard-balancing block never DMAs out of bounds;
        # its contribution is zeroed by the in-kernel row mask.
        return (jnp.minimum(s * inner_steps + j, n_blocks - 1), 0)

    bytes_in = rows * lane * (p2d.dtype.itemsize + t2d.dtype.itemsize)
    cost = pl.CostEstimate(
        flops=8 * total,
        transcendentals=(1 if binary_target else 2) * total,
        bytes_accessed=bytes_in + num_shards * 8 * 128 * 4,
    )

    out = pl.pallas_call(
        kernel,
        out_shape=jax.ShapeDtypeStruct((num_shards * 8, 128), jnp.float32),
        grid_spec=pltpu.PrefetchScalarGridSpec(
            num_scalar_prefetch=0,
            grid=(num_shards, inner_steps),
            in_specs=[
                pl.BlockSpec((block_rows, lane), in_map),
                pl.BlockSpec((block_rows, lane), in_map),
            ],
            out_specs=pl.BlockSpec((8, 128), lambda s, j: (s, 0)),
            scratch_shapes=[pltpu.VMEM((acc_rows, lane), jnp.float32)],
        ),
        compiler_params=pltpu.CompilerParams(
            dimension_semantics=("parallel", "arbitrary"),
            vmem_limit_bytes=vmem_limit_bytes,
        ),
        cost_estimate=cost,
    )(p2d, t2d)

    # One broadcast-filled (8,128) block per shard -> one scalar per shard.
    partials = out[::8, 0]
    return jnp.sum(partials) / jnp.float32(total)


def _reference_bce(pred, target):
    p = pred.reshape(pred.shape[0], -1).astype(jnp.float32)
    t = target.reshape(target.shape[0], -1).astype(jnp.float32)
    log_p = jnp.maximum(jnp.log(p), -100.0)
    log_1mp = jnp.maximum(jnp.log(1.0 - p), -100.0)
    return jnp.mean(-(t * log_p + (1.0 - t) * log_1mp))


if __name__ == "__main__":
    key = jax.random.PRNGKey(0)
    k_pred, k_tgt = jax.random.split(key)

    # Small shapes consistent with a segmentation head: N=2, C=4, H=W=16.
    shape = (2, 4, 16, 16)
    # pred must be a probability in (0, 1) — as produced by a sigmoid upstream.
    pred = jax.nn.sigmoid(jax.random.normal(k_pred, shape, dtype=jnp.float32))
    target = (jax.random.uniform(k_tgt, shape) > 0.5).astype(jnp.float32)

    ref = _reference_bce(pred, target)

    loss = bce_loss(pred, target)
    jax.block_until_ready(loss)
    assert jnp.allclose(loss, ref, rtol=1e-5, atol=1e-5), (loss, ref)

    # Opt-in fast path for hard {0,1} labels (single log per element).
    loss_bin = bce_loss(pred, target, binary_target=True)
    jax.block_until_ready(loss_bin)
    assert jnp.allclose(loss_bin, ref, rtol=1e-5, atol=1e-5), (loss_bin, ref)

    print("KERNEL_OK")
</pallas_src>

<mosaic_0001>
module attributes {stable_mosaic.version = 11 : i64} {
  func.func @kernel(%arg0: i32, %arg1: i32, %arg2: memref<8x256xf32, #tpu.memory_space<vmem>>, %arg3: memref<8x256xbf16, #tpu.memory_space<vmem>>, %arg4: memref<8x128xf32, #tpu.memory_space<vmem>>, %arg5: memref<8x256xf32, #tpu.memory_space<vmem>>) attributes {dimension_semantics = [#tpu.dimension_semantics<parallel>, #tpu.dimension_semantics<arbitrary>], iteration_bounds = array<i64: 1, 1>, scalar_prefetch = 0 : i64, scratch_operands = 1 : i64, tpu.core_type = #tpu.core_type<tc>, window_params = [{transform_indices = @transform_0, window_bounds = array<i64: 8, 256>}, {transform_indices = @transform_1, window_bounds = array<i64: 8, 256>}, {transform_indices = @transform_2, window_bounds = array<i64: 8, 128>}]} {
    %c0_i32 = arith.constant 0 : i32
    %0 = arith.cmpi eq, %arg1, %c0_i32 : i32
    %1 = arith.extui %0 : i1 to i32
    %c0_i32_0 = arith.constant 0 : i32
    %2 = arith.cmpi ne, %1, %c0_i32_0 : i32
    scf.if %2 {
      %cst_13 = arith.constant 0.000000e+00 : f32
      %25 = vector.broadcast %cst_13 : f32 to vector<8x256xf32>
      %c0_14 = arith.constant 0 : index
      %c0_15 = arith.constant 0 : index
      %26 = vector.load %arg5[%c0_14, %c0_15] : memref<8x256xf32, #tpu.memory_space<vmem>>, vector<8x256xf32>
      tpu.vector_store %arg5[%c0_14, %c0_15], %25 {strides = array<i32>} : memref<8x256xf32, #tpu.memory_space<vmem>>, vector<8x256xf32>,
    } else {
    }
    %c0 = arith.constant 0 : index
    %c0_1 = arith.constant 0 : index
    %3 = vector.load %arg2[%c0, %c0_1] : memref<8x256xf32, #tpu.memory_space<vmem>>, vector<8x256xf32>
    %c0_2 = arith.constant 0 : index
    %c0_3 = arith.constant 0 : index
    %4 = vector.load %arg3[%c0_2, %c0_3] : memref<8x256xbf16, #tpu.memory_space<vmem>>, vector<8x256xbf16>
    %5 = arith.extf %4 : vector<8x256xbf16> to vector<8x256xf32>
    %6 = math.log %3 : vector<8x256xf32>
    %cst = arith.constant -1.000000e+02 : f32
    %7 = vector.broadcast %cst : f32 to vector<8x256xf32>
    %8 = arith.maximumf %6, %7 : vector<8x256xf32>
    %cst_4 = arith.constant 1.000000e+00 : f32
    %9 = vector.broadcast %cst_4 : f32 to vector<8x256xf32>
    %10 = arith.subf %9, %3 : vector<8x256xf32>
    %11 = math.log %10 : vector<8x256xf32>
    %cst_5 = arith.constant -1.000000e+02 : f32
    %12 = vector.broadcast %cst_5 : f32 to vector<8x256xf32>
    %13 = arith.maximumf %11, %12 : vector<8x256xf32>
    %14 = arith.subf %8, %13 : vector<8x256xf32>
    %15 = arith.mulf %5, %14 : vector<8x256xf32>
    %16 = arith.addf %13, %15 : vector<8x256xf32>
    %cst_6 = arith.constant 0.000000e+00 : f32
    %17 = vector.broadcast %cst_6 : f32 to vector<8x256xf32>
    %18 = arith.subf %17, %16 : vector<8x256xf32>
    %c0_7 = arith.constant 0 : index
    %c0_8 = arith.constant 0 : index
    %19 = vector.load %arg5[%c0_7, %c0_8] : memref<8x256xf32, #tpu.memory_space<vmem>>, vector<8x256xf32>
    %20 = arith.addf %19, %18 : vector<8x256xf32>
    %c0_9 = arith.constant 0 : index
    %c0_10 = arith.constant 0 : index
    %21 = vector.load %arg5[%c0_9, %c0_10] : memref<8x256xf32, #tpu.memory_space<vmem>>, vector<8x256xf32>
    tpu.vector_store %arg5[%c0_9, %c0_10], %20 {strides = array<i32>} : memref<8x256xf32, #tpu.memory_space<vmem>>, vector<8x256xf32>,
    %c0_i32_11 = arith.constant 0 : i32
    %22 = arith.cmpi eq, %arg1, %c0_i32_11 : i32
    %23 = arith.extui %22 : i1 to i32
    %c0_i32_12 = arith.constant 0 : i32
    %24 = arith.cmpi ne, %23, %c0_i32_12 : i32
    scf.if %24 {
      %c0_13 = arith.constant 0 : index
      %c0_14 = arith.constant 0 : index
      %25 = vector.load %arg5[%c0_13, %c0_14] : memref<8x256xf32, #tpu.memory_space<vmem>>, vector<8x256xf32>
      %26 = vector.shape_cast %25 : vector<8x256xf32> to vector<1x8x256xf32>
      %cst_15 = arith.constant dense<0.000000e+00> : vector<1xf32>
      %27 = vector.multi_reduction <add>, %26, %cst_15 [1, 2] : vector<1x8x256xf32> to vector<1xf32>
      %28 = vector.shape_cast %27 : vector<1xf32> to vector<1x1x1xf32>
      %29 = vector.extract %28[0, 0, 0] : f32 from vector<1x1x1xf32>
      %30 = vector.broadcast %29 : f32 to vector<8x128xf32>
      %c0_16 = arith.constant 0 : index
      %c0_17 = arith.constant 0 : index
      %31 = vector.load %arg4[%c0_16, %c0_17] : memref<8x128xf32, #tpu.memory_space<vmem>>, vector<8x128xf32>
      tpu.vector_store %arg4[%c0_16, %c0_17], %30 {strides = array<i32>} : memref<8x128xf32, #tpu.memory_space<vmem>>, vector<8x128xf32>,
    } else {
    }
    return
  }
  func.func @transform_0(%arg0: i32, %arg1: i32) -> (i32, i32) {
    %c1_i32 = arith.constant 1 : i32
    %0 = arith.muli %arg0, %c1_i32 : i32
    %1 = arith.addi %0, %arg1 : i32
    %c0_i32 = arith.constant 0 : i32
    %2 = arith.minsi %1, %c0_i32 : i32
    %c0_i32_0 = arith.constant 0 : i32
    %c0_i32_1 = arith.constant 0 : i32
    return %2, %c0_i32_0 : i32, i32
  }
  func.func @transform_1(%arg0: i32, %arg1: i32) -> (i32, i32) {
    %c1_i32 = arith.constant 1 : i32
    %0 = arith.muli %arg0, %c1_i32 : i32
    %1 = arith.addi %0, %arg1 : i32
    %c0_i32 = arith.constant 0 : i32
    %2 = arith.minsi %1, %c0_i32 : i32
    %c0_i32_0 = arith.constant 0 : i32
    %c0_i32_1 = arith.constant 0 : i32
    return %2, %c0_i32_0 : i32, i32
  }
  func.func @transform_2(%arg0: i32, %arg1: i32) -> (i32, i32) {
    %c0_i32 = arith.constant 0 : i32
    %c0_i32_0 = arith.constant 0 : i32
    return %arg0, %c0_i32 : i32, i32
  }
}

</mosaic_0001>

<llo_original>
// kernel: tpu_custom_call.1
$region0: #{tpu_custom_call.1}
  #allocation0 [shape = 'u32[]', space=smem, size = 0x4, offset = 0x4, fixed_abs, tag = 'smem constant byte address 0x4 - core index']
  #allocation1 [shape = 'u32[144,128]{1,0:T(1,128)}', space=vmem, size = 0x12000, scoped, tag = 'internal scratch']
  #allocation2 [shape = 'f32[8,256]{1,0:T(8,128)}', space=vmem, size = 0x2000, scoped, tag = 'scratch operand']
  %s0 = inlined_call_operand.hbm [shape: f32[8,256], index: 0, kind: input, shape index: {}]
  %s1 = inlined_call_operand.hbm [shape: bf16[8,256], index: 1, kind: input, shape index: {}]
  %s2 = inlined_call_operand.hbm [shape: f32[8,128], index: 2, kind: output, shape index: {}]
  %s3 = sld [smem:[#allocation0]]
  $region34: #{tpu_custom_call.1} parent=0
    _
  %s5 = ssub.s32 1, %s3
  %s6 = scalar_select 0, %s5, %s3
  $region1: #{tpu_custom_call.1} parent=0
    #allocation3 [shape = 'u8[8192]{0}', space=vmem, size = 0x2000, scoped, tag = 'input window, operand 0, single buffered']
    #allocation4 [shape = 's32[1]{0}', space=sflag, size = 0x4, scoped, tag = 'scoped memory for tpu_custom_call.1']
    #allocation5 [shape = 's32[1]{0}', space=sflag, size = 0x4, scoped, tag = 'scoped memory for tpu_custom_call.1']
    #allocation6 [shape = 'u8[4096]{0}', space=vmem, size = 0x1000, scoped, tag = 'input window, operand 1, single buffered']
    #allocation7 [shape = 's32[1]{0}', space=sflag, size = 0x4, scoped, tag = 'scoped memory for tpu_custom_call.1']
    #allocation8 [shape = 'u8[4096]{0}', space=vmem, size = 0x1000, scoped, tag = 'output window, operand 0, single buffered']
    %7 = vsyncpa [#allocation4], 0
    %8 = vsyncpa [#allocation7], 0
    %9 = vsyncpa [#allocation5], 0
    // Predicated region
    $region2: #{tpu_custom_call.1} parent=1 // pred_check
      _
    $region3: #{tpu_custom_call.1} parent=1 // pred_check_branch
      %11 = sbr.rel (0) target = $region5
    $region4: #{tpu_custom_call.1} parent=1 // pred_region
      %s12 = sadd.s32 0, 0
      %p13 = scmp.lt.s32.totalorder %s12, 0
      %s14 = scalar_select %p13, %s12, 0
      %s16 = ssub.s32 256, 256
      %17 = vsyncadd [#allocation4], %s16
      %s18 = smul.addr %s14, 2
      %s19 = smul.addr %s18, 128
      %s20 = scalar_lea.hbm %s0, %s19
      %s22 = sshll.u32 [#allocation3], 4
      %s23 = int_to_ptr.vmem [resolvable:$true] %s22
      %25 = dma.hbm_to_vmem [thread:$0]  %s20, 256, %s23, [#allocation4]
    $region5: #{tpu_custom_call.1} parent=1 // pred_fallthru
      _
    // Predicated region
    $region6: #{tpu_custom_call.1} parent=1 // pred_check
      _
    $region7: #{tpu_custom_call.1} parent=1 // pred_check_branch
      %27 = sbr.rel (0) target = $region9
    $region8: #{tpu_custom_call.1} parent=1 // pred_region
      %s28 = sadd.s32 0, 0
      %p29 = scmp.lt.s32.totalorder %s28, 0
      %s30 = scalar_select %p29, %s28, 0
      %s32 = ssub.s32 128, 128
      %33 = vsyncadd [#allocation7], %s32
      %s34 = smul.addr %s30, 2
      %s35 = smul.addr %s34, 64
      %s36 = scalar_lea.hbm %s1, %s35
      %s38 = sshll.u32 [#allocation6], 4
      %s39 = int_to_ptr.vmem [resolvable:$true] %s38
      %41 = dma.hbm_to_vmem [thread:$0]  %s36, 128, %s39, [#allocation7]
    $region9: #{tpu_custom_call.1} parent=1 // pred_fallthru
      _
    // Predicated region
    $region10: #{tpu_custom_call.1} parent=1 // pred_check
      _
    $region11: #{tpu_custom_call.1} parent=1 // pred_check_branch
      %43 = sbr.rel (0) target = $region13
    $region12: #{tpu_custom_call.1} parent=1 // pred_region
      %44 = dma.done [#allocation4], 256
    $region13: #{tpu_custom_call.1} parent=1 // pred_fallthru
      _
    // Predicated region
    $region14: #{tpu_custom_call.1} parent=1 // pred_check
      _
    $region15: #{tpu_custom_call.1} parent=1 // pred_check_branch
      %46 = sbr.rel (0) target = $region17
    $region16: #{tpu_custom_call.1} parent=1 // pred_region
      %47 = dma.done [#allocation7], 128
    $region17: #{tpu_custom_call.1} parent=1 // pred_fallthru
      _
    %s48 = sadd.s32 0, 0
    %p49 = scmp.lt.s32.totalorder %s48, 0
    %s50 = scalar_select %p49, %s48, 0
    %s51 = sadd.s32 0, 0
    %p52 = scmp.lt.s32.totalorder %s51, 0
    %s53 = scalar_select %p52, %s51, 0
    %p54 = scmp.eq.s32.totalorder 0, 0
    // Predicated region
    $region18: #{tpu_custom_call.1} parent=1 // pred_check
      %p55 = pneg %p54
    $region19: #{tpu_custom_call.1} parent=1 // pred_check_branch
      %57 = sbr.rel (%p55) target = $region21
    $region20: #{tpu_custom_call.1} parent=1 // pred_region
      %58 = vst [vmem:[#allocation2] sm:$0xff] 0.0
      %59 = vst [vmem:[#allocation2 + $0x8] sm:$0xff] 0.0
    $region21: #{tpu_custom_call.1} parent=1 // pred_fallthru
      _
    %v60 = vld [vmem:[#allocation3] sm:$0xff]
    %v61 = vld [vmem:[#allocation3 + $0x8] sm:$0xff]
    %v62 = vld [vmem:[#allocation6] sm:$0xff]
    %v63 = vunpack.c.l.bf16 %v62
    %v64 = vunpack.c.h.bf16 %v62
    %v65 = vlog2.pop %v60
    %v66 = vmul.f32 %v65, 0.6931472
    %v67 = vlog2.pop %v61
    %v68 = vmul.f32 %v67, 0.6931472
    %v69 = vmax.f32 %v66, -100.0
    %v70 = vmax.f32 %v68, -100.0
    %v71 = vsub.f32 1.0, %v60
    %v72 = vsub.f32 1.0, %v61
    %v73 = vlog2.pop %v71
    %v74 = vmul.f32 %v73, 0.6931472
    %v75 = vlog2.pop %v72
    %v76 = vmul.f32 %v75, 0.6931472
    %v77 = vmax.f32 %v74, -100.0
    %v78 = vmax.f32 %v76, -100.0
    %v79 = vsub.f32 %v69, %v77
    %v80 = vsub.f32 %v70, %v78
    %v81 = vmul.f32 %v63, %v79
    %v82 = vmul.f32 %v64, %v80
    %v83 = vadd.f32 %v77, %v81
    %v84 = vadd.f32 %v78, %v82
    %v85 = vsub.f32 0.0, %v83
    %v86 = vsub.f32 0.0, %v84
    %v87 = vld [vmem:[#allocation2] sm:$0xff]
    %v88 = vld [vmem:[#allocation2 + $0x8] sm:$0xff]
    %v89 = vadd.f32 %v87, %v85
    %v90 = vadd.f32 %v88, %v86
    %91 = vst [vmem:[#allocation2] sm:$0xff] %v89
    %92 = vst [vmem:[#allocation2 + $0x8] sm:$0xff] %v90
    // Predicated region
    $region22: #{tpu_custom_call.1} parent=1 // pred_check
      %p93 = pneg %p54
    $region23: #{tpu_custom_call.1} parent=1 // pred_check_branch
      %95 = sbr.rel (%p93) target = $region25
    $region24: #{tpu_custom_call.1} parent=1 // pred_region
      %v96 = vld [vmem:[#allocation2] sm:$0xff]
      %v97 = vld [vmem:[#allocation2 + $0x8] sm:$0xff]
      %v98 = vadd.f32 %v96, %v97
      %99 = vadd.xlane.f32.xlu0 %v98
      %v100 = vpop.xlane.xlu0 %99
      %v101 = vrot.slane %v100, 4
      %v102 = vadd.f32 %v100, %v101
      %v103 = vrot.slane %v102, 2
      %v104 = vadd.f32 %v102, %v103
      %v105 = vrot.slane %v104, 1
      %v106 = vadd.f32 %v104, %v105
      %s107 = vtos %v106
      %v108 = vstv %s107
      %109 = vst [vmem:[#allocation8] sm:$0xff] %v108
    $region25: #{tpu_custom_call.1} parent=1 // pred_fallthru
      _
    // Predicated region
    $region26: #{tpu_custom_call.1} parent=1 // pred_check
      _
    $region27: #{tpu_custom_call.1} parent=1 // pred_check_branch
      %111 = sbr.rel (0) target = $region29
    $region28: #{tpu_custom_call.1} parent=1 // pred_region
      %s113 = ssub.s32 128, 128
      %114 = vsyncadd [#allocation5], %s113
      %s116 = sshll.u32 [#allocation8], 4
      %s117 = int_to_ptr.vmem [resolvable:$true] %s116
      %119 = dma.vmem_to_hbm [thread:$0]  %s117, 128, %s2, [#allocation5]
    $region29: #{tpu_custom_call.1} parent=1 // pred_fallthru
      _
    // Predicated region
    $region30: #{tpu_custom_call.1} parent=1 // pred_check
      _
    $region31: #{tpu_custom_call.1} parent=1 // pred_check_branch
      %121 = sbr.rel (0) target = $region33
    $region32: #{tpu_custom_call.1} parent=1 // pred_region
      %122 = dma.done [#allocation5], 128
    $region33: #{tpu_custom_call.1} parent=1 // pred_fallthru
      _
    %123 = vsyncpa [#allocation4], 1
    %124 = vsyncpa [#allocation7], 1
    %125 = vsyncpa [#allocation5], 1

</llo_original>
